<compile_context>
chip_gen: v7x
topology: tpu7x:2x2x1
jax: 0.10.0
libtpu: 0.0.40
codegen_flags: <defaults>
</compile_context>

<pallas_src>
import functools

import jax
import jax.numpy as jnp
from jax.experimental import pallas as pl
from jax.experimental.pallas import tpu as pltpu


def _round_up(x, m):
    return ((x + m - 1) // m) * m


def _pad2(x, rows, cols):
    out = jnp.zeros((rows, cols), x.dtype)
    return out.at[:x.shape[0], :x.shape[1]].set(x)


def _pad1(x, cols):
    out = jnp.zeros((cols,), x.dtype)
    return out.at[:x.shape[0]].set(x)


def zone_env_goal_kernel(og_ref, zf_ref, wsm_ref, wbg_ref, b_ref, out_ref, *,
                         n_zones):
    """One batch tile of the ZoneEnvGoalModel forward.

    og_ref  : (TB, KS)       bf16   [obs ++ goal, zero-padded to KS]
    zf_ref  : (TB*N, KS)     bf16   [zone features, zone axis flattened into rows]
    wsm_ref : (3, KS, Hp)    bf16   [W1_og, W1_zone, Wc_og]
    wbg_ref : (3, Hp, Hp)    bf16   [W2, W3, Wc_zone]
    b_ref   : (4, Hp)        f32    [b1, b2, b3, bc]
    out_ref : (TB, Hp)       f32
    """
    tb = og_ref.shape[0]
    hp = out_ref.shape[-1]
    n = n_zones

    og = og_ref[...]                      # (TB, KS)  bf16
    zf = zf_ref[...]                      # (TB*N, KS) bf16

    w1og = wsm_ref[0]                     # (KS, Hp)
    w1z = wsm_ref[1]
    wcog = wsm_ref[2]
    w2 = wbg_ref[0]                       # (Hp, Hp)
    w3 = wbg_ref[1]
    wcz = wbg_ref[2]

    b = b_ref[...]                        # (4, Hp) f32
    b1 = b[0:1, :]
    b2 = b[1:2, :]
    b3 = b[2:3, :]
    bc = b[3:4, :]

    # zone_net_ layer 1:  cat([og (broadcast over zones), zone]) @ W1 + b1
    #   == og @ W1[:OG]  (broadcast)  +  zone @ W1[OG:]  + b1
    t_og = jnp.dot(og, w1og, preferred_element_type=jnp.float32)        # (TB, Hp)
    t_z = jnp.dot(zf, w1z, preferred_element_type=jnp.float32)          # (TB*N, Hp)
    h1 = jnp.maximum(t_z.reshape(tb, n, hp) + t_og[:, None, :] + b1, 0.0)
    h1 = h1.reshape(tb * n, hp).astype(jnp.bfloat16)

    # zone_net_ layer 2 (ReLU)
    h2 = jnp.maximum(
        jnp.dot(h1, w2, preferred_element_type=jnp.float32) + b2, 0.0)  # (TB*N, Hp) f32

    # mean over zones folded through (linear) layer 3:
    #   mean_n(h2_n @ W3 + b3) == mean_n(h2_n) @ W3 + b3
    h2_mean = (h2.reshape(tb, n, hp).sum(axis=1) * (1.0 / n)).astype(jnp.bfloat16)
    zone_emb = jnp.dot(h2_mean, w3, preferred_element_type=jnp.float32) + b3  # (TB, Hp)

    # combine_net_:  cat([og, zone_emb]) @ Wc + bc
    out = (jnp.dot(og, wcog, preferred_element_type=jnp.float32)
           + jnp.dot(zone_emb.astype(jnp.bfloat16), wcz,
                     preferred_element_type=jnp.float32)
           + bc)
    out_ref[...] = out.astype(out_ref.dtype)


def pack_params(params, obs_size, goal_dim, zone_size, h_dim):
    """One-time packing/padding of weights (do this outside the hot call path)."""
    og = obs_size + goal_dim
    ks = _round_up(max(og, zone_size), 8)          # small contraction dim, lane-aligned
    hp = _round_up(h_dim, 128)                     # lane-dense hidden dim

    w1, wc = params['w1'], params['wc']
    w_small = jnp.stack([
        _pad2(w1[:og], ks, hp),                    # W1 rows for [obs, goal]
        _pad2(w1[og:], ks, hp),                    # W1 rows for zone features
        _pad2(wc[:og], ks, hp),                    # Wc rows for [obs, goal]
    ]).astype(jnp.bfloat16)                        # (3, KS, Hp)

    w_big = jnp.stack([
        _pad2(params['w2'], hp, hp),
        _pad2(params['w3'], hp, hp),
        _pad2(wc[og:], hp, hp),                    # Wc rows for zone_emb
    ]).astype(jnp.bfloat16)                        # (3, Hp, Hp)

    biases = jnp.stack([
        _pad1(params['b1'], hp),
        _pad1(params['b2'], hp),
        _pad1(params['b3'], hp),
        _pad1(params['bc'], hp),
    ]).astype(jnp.float32)                         # (4, Hp)

    return {'w_small': w_small, 'w_big': w_big, 'biases': biases,
            'h_dim': h_dim, 'hp': hp, 'ks': ks}


def zone_env_goal_forward(obs, goal, zone_obs, packed):
    """Pallas wrapper reproducing ZoneEnvGoalModel.forward."""
    B = obs.shape[0]
    _, N, Z = zone_obs.shape
    H, Hp, KS = packed['h_dim'], packed['hp'], packed['ks']

    og = jnp.concatenate([obs, goal], axis=-1).astype(jnp.float32)   # (B, OG) glue
    OG = og.shape[-1]
    assert OG <= KS and Z <= KS

    # Batch tiling: TB rows per grid step (TB*N zone rows), pipelined by BlockSpec.
    TB_MAX = 256
    if B <= TB_MAX:
        TB = max(_round_up(B, 8), 8)
        B_pad = TB
    else:
        TB = TB_MAX
        B_pad = _round_up(B, TB)
    nb = B_pad // TB

    # Pad batch + small feature dims; cast matmul operands to bf16 (halves DMA bytes).
    og_p = jnp.zeros((B_pad, KS), jnp.bfloat16).at[:B, :OG].set(
        og.astype(jnp.bfloat16))
    zf = zone_obs.reshape(B * N, Z).astype(jnp.bfloat16)
    zf_p = jnp.zeros((B_pad * N, KS), jnp.bfloat16).at[:B * N, :Z].set(zf)

    kernel = functools.partial(zone_env_goal_kernel, n_zones=N)

    out = pl.pallas_call(
        kernel,
        out_shape=jax.ShapeDtypeStruct((B_pad, Hp), jnp.float32),
        grid=(nb,),
        in_specs=[
            pl.BlockSpec((TB, KS), lambda i: (i, 0)),           # og tile
            pl.BlockSpec((TB * N, KS), lambda i: (i, 0)),       # flattened zone tile
            pl.BlockSpec((3, KS, Hp), lambda i: (0, 0, 0)),     # small weights (resident)
            pl.BlockSpec((3, Hp, Hp), lambda i: (0, 0, 0)),     # big weights (resident)
            pl.BlockSpec((4, Hp), lambda i: (0, 0)),            # biases (resident)
        ],
        out_specs=pl.BlockSpec((TB, Hp), lambda i: (i, 0)),     # lane-dense output slab
        compiler_params=pltpu.CompilerParams(
            dimension_semantics=("parallel",)),
    )(og_p, zf_p, packed['w_small'], packed['w_big'], packed['biases'])

    return out[:B, :H]


def reference_forward(obs, goal, zone_obs, params):
    """Pure-JAX f32 reference matching the torch module exactly."""
    og = jnp.concatenate([obs, goal], axis=-1)
    B, OG = og.shape
    N = zone_obs.shape[1]
    rep = jnp.broadcast_to(og[:, None, :], (B, N, OG))
    x = jnp.concatenate([rep, zone_obs], axis=-1)
    h = jnp.maximum(x @ params['w1'] + params['b1'], 0.0)
    h = jnp.maximum(h @ params['w2'] + params['b2'], 0.0)
    h = h @ params['w3'] + params['b3']
    zone_emb = h.sum(axis=1) / N
    return jnp.concatenate([og, zone_emb], axis=-1) @ params['wc'] + params['bc']


def make_params(key, obs_size, goal_dim, zone_size, h_dim):
    ks = jax.random.split(key, 8)
    in1 = obs_size + goal_dim + zone_size
    inc = obs_size + goal_dim + h_dim
    scale = 0.1
    return {
        'w1': scale * jax.random.normal(ks[0], (in1, h_dim), jnp.float32),
        'b1': scale * jax.random.normal(ks[1], (h_dim,), jnp.float32),
        'w2': scale * jax.random.normal(ks[2], (h_dim, h_dim), jnp.float32),
        'b2': scale * jax.random.normal(ks[3], (h_dim,), jnp.float32),
        'w3': scale * jax.random.normal(ks[4], (h_dim, h_dim), jnp.float32),
        'b3': scale * jax.random.normal(ks[5], (h_dim,), jnp.float32),
        'wc': scale * jax.random.normal(ks[6], (inc, h_dim), jnp.float32),
        'bc': scale * jax.random.normal(ks[7], (h_dim,), jnp.float32),
    }


if __name__ == "__main__":
    # Shapes consistent with obs_space = {'obs': (4,), 'zone_obs': (8, 4), 'goal': (2,)}
    B, obs_size, goal_dim, zone_size, n_zones, h_dim = 2, 4, 2, 4, 8, 32

    key = jax.random.PRNGKey(0)
    k_obs, k_goal, k_zone, k_params = jax.random.split(key, 4)

    obs = jax.random.normal(k_obs, (B, obs_size), jnp.float32)
    goal = jax.random.normal(k_goal, (B, goal_dim), jnp.float32)
    zone_obs = jax.random.normal(k_zone, (B, n_zones, zone_size), jnp.float32)
    params = make_params(k_params, obs_size, goal_dim, zone_size, h_dim)

    packed = pack_params(params, obs_size, goal_dim, zone_size, h_dim)
    out = zone_env_goal_forward(obs, goal, zone_obs, packed)
    out = jax.block_until_ready(out)

    ref = reference_forward(obs, goal, zone_obs, params)
    assert out.shape == (B, h_dim)
    # bf16 MXU operands (f32 accumulation) -> tolerance relaxed vs pure-f32 reference.
    assert jnp.allclose(out, ref, atol=2e-2, rtol=2e-2), "mismatch vs reference"

    print("KERNEL_OK")
</pallas_src>

<mosaic_0001>
module attributes {stable_mosaic.version = 11 : i64} {
  func.func @zone_env_goal_kernel(%arg0: i32, %arg1: memref<8x8xbf16, #tpu.memory_space<vmem>>, %arg2: memref<64x8xbf16, #tpu.memory_space<vmem>>, %arg3: memref<3x8x128xbf16, #tpu.memory_space<vmem>>, %arg4: memref<3x128x128xbf16, #tpu.memory_space<vmem>>, %arg5: memref<4x128xf32, #tpu.memory_space<vmem>>, %arg6: memref<8x128xf32, #tpu.memory_space<vmem>>) attributes {dimension_semantics = [#tpu.dimension_semantics<parallel>], iteration_bounds = array<i64: 1>, scalar_prefetch = 0 : i64, scratch_operands = 0 : i64, tpu.core_type = #tpu.core_type<tc>, window_params = [{transform_indices = @transform_0, window_bounds = array<i64: 8, 8>}, {transform_indices = @transform_1, window_bounds = array<i64: 64, 8>}, {pipeline_mode = #tpu.pipeline_mode<synchronous>, transform_indices = @transform_2, window_bounds = array<i64: 3, 8, 128>}, {pipeline_mode = #tpu.pipeline_mode<synchronous>, transform_indices = @transform_3, window_bounds = array<i64: 3, 128, 128>}, {pipeline_mode = #tpu.pipeline_mode<synchronous>, transform_indices = @transform_4, window_bounds = array<i64: 4, 128>}, {transform_indices = @transform_5, window_bounds = array<i64: 8, 128>}]} {
    %c0 = arith.constant 0 : index
    %c0_0 = arith.constant 0 : index
    %0 = vector.load %arg1[%c0, %c0_0] : memref<8x8xbf16, #tpu.memory_space<vmem>>, vector<8x8xbf16>
    %c0_1 = arith.constant 0 : index
    %c0_2 = arith.constant 0 : index
    %1 = vector.load %arg2[%c0_1, %c0_2] : memref<64x8xbf16, #tpu.memory_space<vmem>>, vector<64x8xbf16>
    %c0_3 = arith.constant 0 : index
    %c0_4 = arith.constant 0 : index
    %c0_5 = arith.constant 0 : index
    %2 = vector.load %arg3[%c0_3, %c0_4, %c0_5] : memref<3x8x128xbf16, #tpu.memory_space<vmem>>, vector<1x8x128xbf16>
    %3 = vector.shape_cast %2 : vector<1x8x128xbf16> to vector<8x128xbf16>
    %c1 = arith.constant 1 : index
    %c0_6 = arith.constant 0 : index
    %c0_7 = arith.constant 0 : index
    %4 = vector.load %arg3[%c1, %c0_6, %c0_7] : memref<3x8x128xbf16, #tpu.memory_space<vmem>>, vector<1x8x128xbf16>
    %5 = vector.shape_cast %4 : vector<1x8x128xbf16> to vector<8x128xbf16>
    %c2 = arith.constant 2 : index
    %c0_8 = arith.constant 0 : index
    %c0_9 = arith.constant 0 : index
    %6 = vector.load %arg3[%c2, %c0_8, %c0_9] : memref<3x8x128xbf16, #tpu.memory_space<vmem>>, vector<1x8x128xbf16>
    %7 = vector.shape_cast %6 : vector<1x8x128xbf16> to vector<8x128xbf16>
    %c0_10 = arith.constant 0 : index
    %c0_11 = arith.constant 0 : index
    %c0_12 = arith.constant 0 : index
    %8 = vector.load %arg4[%c0_10, %c0_11, %c0_12] : memref<3x128x128xbf16, #tpu.memory_space<vmem>>, vector<1x128x128xbf16>
    %9 = vector.shape_cast %8 : vector<1x128x128xbf16> to vector<128x128xbf16>
    %c1_13 = arith.constant 1 : index
    %c0_14 = arith.constant 0 : index
    %c0_15 = arith.constant 0 : index
    %10 = vector.load %arg4[%c1_13, %c0_14, %c0_15] : memref<3x128x128xbf16, #tpu.memory_space<vmem>>, vector<1x128x128xbf16>
    %11 = vector.shape_cast %10 : vector<1x128x128xbf16> to vector<128x128xbf16>
    %c2_16 = arith.constant 2 : index
    %c0_17 = arith.constant 0 : index
    %c0_18 = arith.constant 0 : index
    %12 = vector.load %arg4[%c2_16, %c0_17, %c0_18] : memref<3x128x128xbf16, #tpu.memory_space<vmem>>, vector<1x128x128xbf16>
    %13 = vector.shape_cast %12 : vector<1x128x128xbf16> to vector<128x128xbf16>
    %c0_19 = arith.constant 0 : index
    %c0_20 = arith.constant 0 : index
    %14 = vector.load %arg5[%c0_19, %c0_20] : memref<4x128xf32, #tpu.memory_space<vmem>>, vector<4x128xf32>
    %15 = vector.extract_strided_slice %14 {offsets = [0, 0], sizes = [1, 128], strides = [1, 1]} : vector<4x128xf32> to vector<1x128xf32>
    %16 = vector.extract_strided_slice %14 {offsets = [1, 0], sizes = [1, 128], strides = [1, 1]} : vector<4x128xf32> to vector<1x128xf32>
    %17 = vector.extract_strided_slice %14 {offsets = [2, 0], sizes = [1, 128], strides = [1, 1]} : vector<4x128xf32> to vector<1x128xf32>
    %18 = vector.extract_strided_slice %14 {offsets = [3, 0], sizes = [1, 128], strides = [1, 1]} : vector<4x128xf32> to vector<1x128xf32>
    %cst = arith.constant dense<0.000000e+00> : vector<8x128xf32>
    %19 = tpu.matmul %0, %3, %cst {dimension_numbers = #tpu.dot_dimension_numbers<[1], [0], [0], [1], [0, 0, 1, 1], [], []>} : vector<8x8xbf16>, vector<8x128xbf16>, vector<8x128xf32> -> vector<8x128xf32>
    %cst_21 = arith.constant dense<0.000000e+00> : vector<64x128xf32>
    %20 = tpu.matmul %1, %5, %cst_21 {dimension_numbers = #tpu.dot_dimension_numbers<[1], [0], [0], [1], [0, 0, 1, 1], [], []>} : vector<64x8xbf16>, vector<8x128xbf16>, vector<64x128xf32> -> vector<64x128xf32>
    %21 = vector.shape_cast %20 : vector<64x128xf32> to vector<8x8x128xf32>
    %22 = vector.shape_cast %19 : vector<8x128xf32> to vector<8x1x128xf32>
    %23 = vector.broadcast %22 : vector<8x1x128xf32> to vector<8x8x128xf32>
    %24 = arith.addf %21, %23 : vector<8x8x128xf32>
    %25 = vector.shape_cast %15 : vector<1x128xf32> to vector<1x1x128xf32>
    %26 = vector.broadcast %25 : vector<1x1x128xf32> to vector<8x8x128xf32>
    %27 = arith.addf %24, %26 : vector<8x8x128xf32>
    %cst_22 = arith.constant 0.000000e+00 : f32
    %28 = vector.broadcast %cst_22 : f32 to vector<8x8x128xf32>
    %29 = arith.maximumf %27, %28 : vector<8x8x128xf32>
    %30 = vector.shape_cast %29 : vector<8x8x128xf32> to vector<64x128xf32>
    %31 = arith.truncf %30 : vector<64x128xf32> to vector<64x128xbf16>
    %cst_23 = arith.constant dense<0.000000e+00> : vector<64x128xf32>
    %32 = tpu.matmul %31, %9, %cst_23 {dimension_numbers = #tpu.dot_dimension_numbers<[1], [0], [0], [1], [0, 0, 1, 1], [], []>} : vector<64x128xbf16>, vector<128x128xbf16>, vector<64x128xf32> -> vector<64x128xf32>
    %33 = vector.broadcast %16 : vector<1x128xf32> to vector<64x128xf32>
    %34 = arith.addf %32, %33 : vector<64x128xf32>
    %cst_24 = arith.constant 0.000000e+00 : f32
    %35 = vector.broadcast %cst_24 : f32 to vector<64x128xf32>
    %36 = arith.maximumf %34, %35 : vector<64x128xf32>
    %37 = vector.shape_cast %36 : vector<64x128xf32> to vector<8x8x128xf32>
    %cst_25 = arith.constant dense<0.000000e+00> : vector<8x128xf32>
    %38 = vector.multi_reduction <add>, %37, %cst_25 [1] : vector<8x8x128xf32> to vector<8x128xf32>
    %cst_26 = arith.constant 1.250000e-01 : f32
    %39 = vector.broadcast %cst_26 : f32 to vector<8x128xf32>
    %40 = arith.mulf %38, %39 : vector<8x128xf32>
    %41 = arith.truncf %40 : vector<8x128xf32> to vector<8x128xbf16>
    %cst_27 = arith.constant dense<0.000000e+00> : vector<8x128xf32>
    %42 = tpu.matmul %41, %11, %cst_27 {dimension_numbers = #tpu.dot_dimension_numbers<[1], [0], [0], [1], [0, 0, 1, 1], [], []>} : vector<8x128xbf16>, vector<128x128xbf16>, vector<8x128xf32> -> vector<8x128xf32>
    %43 = vector.broadcast %17 : vector<1x128xf32> to vector<8x128xf32>
    %44 = arith.addf %42, %43 : vector<8x128xf32>
    %cst_28 = arith.constant dense<0.000000e+00> : vector<8x128xf32>
    %45 = tpu.matmul %0, %7, %cst_28 {dimension_numbers = #tpu.dot_dimension_numbers<[1], [0], [0], [1], [0, 0, 1, 1], [], []>} : vector<8x8xbf16>, vector<8x128xbf16>, vector<8x128xf32> -> vector<8x128xf32>
    %46 = arith.truncf %44 : vector<8x128xf32> to vector<8x128xbf16>
    %cst_29 = arith.constant dense<0.000000e+00> : vector<8x128xf32>
    %47 = tpu.matmul %46, %13, %cst_29 {dimension_numbers = #tpu.dot_dimension_numbers<[1], [0], [0], [1], [0, 0, 1, 1], [], []>} : vector<8x128xbf16>, vector<128x128xbf16>, vector<8x128xf32> -> vector<8x128xf32>
    %48 = arith.addf %45, %47 : vector<8x128xf32>
    %49 = vector.broadcast %18 : vector<1x128xf32> to vector<8x128xf32>
    %50 = arith.addf %48, %49 : vector<8x128xf32>
    %c0_30 = arith.constant 0 : index
    %c0_31 = arith.constant 0 : index
    %51 = vector.load %arg6[%c0_30, %c0_31] : memref<8x128xf32, #tpu.memory_space<vmem>>, vector<8x128xf32>
    tpu.vector_store %arg6[%c0_30, %c0_31], %50 {strides = array<i32>} : memref<8x128xf32, #tpu.memory_space<vmem>>, vector<8x128xf32>,
    return
  }
  func.func @transform_0(%arg0: i32) -> (i32, i32) {
    %c0_i32 = arith.constant 0 : i32
    %c0_i32_0 = arith.constant 0 : i32
    return %arg0, %c0_i32 : i32, i32
  }
  func.func @transform_1(%arg0: i32) -> (i32, i32) {
    %c0_i32 = arith.constant 0 : i32
    %c0_i32_0 = arith.constant 0 : i32
    return %arg0, %c0_i32 : i32, i32
  }
  func.func @transform_2(%arg0: i32) -> (i32, i32, i32) {
    %c0_i32 = arith.constant 0 : i32
    %c0_i32_0 = arith.constant 0 : i32
    %c0_i32_1 = arith.constant 0 : i32
    %c0_i32_2 = arith.constant 0 : i32
    return %c0_i32, %c0_i32_0, %c0_i32_1 : i32, i32, i32
  }
  func.func @transform_3(%arg0: i32) -> (i32, i32, i32) {
    %c0_i32 = arith.constant 0 : i32
    %c0_i32_0 = arith.constant 0 : i32
    %c0_i32_1 = arith.constant 0 : i32
    %c0_i32_2 = arith.constant 0 : i32
    return %c0_i32, %c0_i32_0, %c0_i32_1 : i32, i32, i32
  }
  func.func @transform_4(%arg0: i32) -> (i32, i32) {
    %c0_i32 = arith.constant 0 : i32
    %c0_i32_0 = arith.constant 0 : i32
    %c0_i32_1 = arith.constant 0 : i32
    return %c0_i32, %c0_i32_0 : i32, i32
  }
  func.func @transform_5(%arg0: i32) -> (i32, i32) {
    %c0_i32 = arith.constant 0 : i32
    %c0_i32_0 = arith.constant 0 : i32
    return %arg0, %c0_i32 : i32, i32
  }
}

</mosaic_0001>

<llo_original>
// kernel: tpu_custom_call.1
$region0: #{tpu_custom_call.1}
  #allocation0 [shape = 'u32[]', space=smem, size = 0x4, offset = 0x4, fixed_abs, tag = 'smem constant byte address 0x4 - core index']
  #allocation1 [shape = 'u32[144,128]{1,0:T(1,128)}', space=vmem, size = 0x12000, scoped, tag = 'internal scratch']
  %s0 = inlined_call_operand.vmem [shape: bf16[8,8], index: 0, kind: input, shape index: {}]
  %s1 = inlined_call_operand.vmem [shape: bf16[64,8], index: 1, kind: input, shape index: {}]
  %s2 = inlined_call_operand.vmem [shape: bf16[3,8,128], index: 2, kind: input, shape index: {}]
  %s3 = inlined_call_operand.hbm [shape: bf16[3,128,128], index: 3, kind: input, shape index: {}]
  %s4 = inlined_call_operand.vmem [shape: f32[4,128], index: 4, kind: input, shape index: {}]
  %s5 = inlined_call_operand.hbm [shape: f32[8,128], index: 5, kind: output, shape index: {}]
  %s6 = sld [smem:[#allocation0]]
  $region34: #{tpu_custom_call.1} parent=0
    _
  %s8 = ssub.s32 1, %s6
  %s9 = scalar_select 0, %s8, %s6
  $region1: #{tpu_custom_call.1} parent=0
    #allocation2 [shape = 'u8[98304]{0}', space=vmem, size = 0x18000, scoped, tag = 'input window, operand 3, single buffered']
    #allocation3 [shape = 's32[1]{0}', space=sflag, size = 0x4, scoped, tag = 'scoped memory for tpu_custom_call.1']
    #allocation4 [shape = 's32[1]{0}', space=sflag, size = 0x4, scoped, tag = 'scoped memory for tpu_custom_call.1']
    #allocation5 [shape = 'u8[4096]{0}', space=vmem, size = 0x1000, scoped, tag = 'output window, operand 0, single buffered']
    %10 = vsyncpa [#allocation3], 0
    %11 = vsyncpa [#allocation4], 0
    // Predicated region
    $region2: #{tpu_custom_call.1} parent=1 // pred_check
      _
    $region3: #{tpu_custom_call.1} parent=1 // pred_check_branch
      %13 = sbr.rel (0) target = $region5
    $region4: #{tpu_custom_call.1} parent=1 // pred_region
      _
    $region5: #{tpu_custom_call.1} parent=1 // pred_fallthru
      _
    // Predicated region
    $region6: #{tpu_custom_call.1} parent=1 // pred_check
      _
    $region7: #{tpu_custom_call.1} parent=1 // pred_check_branch
      %15 = sbr.rel (0) target = $region9
    $region8: #{tpu_custom_call.1} parent=1 // pred_region
      _
    $region9: #{tpu_custom_call.1} parent=1 // pred_fallthru
      _
    // Predicated region
    $region10: #{tpu_custom_call.1} parent=1 // pred_check
      _
    $region11: #{tpu_custom_call.1} parent=1 // pred_check_branch
      %17 = sbr.rel (0) target = $region13
    $region12: #{tpu_custom_call.1} parent=1 // pred_region
      _
    $region13: #{tpu_custom_call.1} parent=1 // pred_fallthru
      _
    // Predicated region
    $region14: #{tpu_custom_call.1} parent=1 // pred_check
      _
    $region15: #{tpu_custom_call.1} parent=1 // pred_check_branch
      %19 = sbr.rel (0) target = $region17
    $region16: #{tpu_custom_call.1} parent=1 // pred_region
      %s21 = ssub.s32 3072, 3072
      %22 = vsyncadd [#allocation3], %s21
      %s23 = sshll.u32 [#allocation2], 4
      %s24 = int_to_ptr.vmem [resolvable:$true] %s23
      %29 = dma.hbm_to_vmem [thread:$0]  %s3, 3072, %s24, [#allocation3], 64, 64, 4
    $region17: #{tpu_custom_call.1} parent=1 // pred_fallthru
      _
    // Predicated region
    $region18: #{tpu_custom_call.1} parent=1 // pred_check
      _
    $region19: #{tpu_custom_call.1} parent=1 // pred_check_branch
      %31 = sbr.rel (0) target = $region21
    $region20: #{tpu_custom_call.1} parent=1 // pred_region
      _
    $region21: #{tpu_custom_call.1} parent=1 // pred_fallthru
      _
    // Predicated region
    $region22: #{tpu_custom_call.1} parent=1 // pred_check
      _
    $region23: #{tpu_custom_call.1} parent=1 // pred_check_branch
      %33 = sbr.rel (0) target = $region25
    $region24: #{tpu_custom_call.1} parent=1 // pred_region
      %34 = dma.done [#allocation3], 3072
    $region25: #{tpu_custom_call.1} parent=1 // pred_fallthru
      _
    %v36 = vld [vmem:[%s0] sm:$0xf]
    %v37 = vld [vmem:[%s1] sm:$0xf]
    %v38 = vld [vmem:[%s1 + $0x4] sm:$0xf]
    %v39 = vld [vmem:[%s1 + $0x8] sm:$0xf]
    %v40 = vld [vmem:[%s1 + $0xc] sm:$0xf]
    %v41 = vld [vmem:[%s1 + $0x10] sm:$0xf]
    %v42 = vld [vmem:[%s1 + $0x14] sm:$0xf]
    %v43 = vld [vmem:[%s1 + $0x18] sm:$0xf]
    %v44 = vld [vmem:[%s1 + $0x1c] sm:$0xf]
    %v45 = vld [vmem:[%s2] sm:$0xf]
    %s46 = scalar_lea.vmem %s2, 4
    %v47 = vld [vmem:[%s46] sm:$0xf]
    %s48 = scalar_lea.vmem %s2, 8
    %v49 = vld [vmem:[%s48] sm:$0xf]
    %v50 = vld [vmem:[#allocation2] sm:$0xf]
    %v51 = vld [vmem:[#allocation2 + $0x4] sm:$0xf]
    %v52 = vld [vmem:[#allocation2 + $0x8] sm:$0xf]
    %v53 = vld [vmem:[#allocation2 + $0xc] sm:$0xf]
    %v54 = vld [vmem:[#allocation2 + $0x10] sm:$0xf]
    %v55 = vld [vmem:[#allocation2 + $0x14] sm:$0xf]
    %v56 = vld [vmem:[#allocation2 + $0x18] sm:$0xf]
    %v57 = vld [vmem:[#allocation2 + $0x1c] sm:$0xf]
    %v58 = vld [vmem:[#allocation2 + $0x20] sm:$0xf]
    %v59 = vld [vmem:[#allocation2 + $0x24] sm:$0xf]
    %v60 = vld [vmem:[#allocation2 + $0x28] sm:$0xf]
    %v61 = vld [vmem:[#allocation2 + $0x2c] sm:$0xf]
    %v62 = vld [vmem:[#allocation2 + $0x30] sm:$0xf]
    %v63 = vld [vmem:[#allocation2 + $0x34] sm:$0xf]
    %v64 = vld [vmem:[#allocation2 + $0x38] sm:$0xf]
    %v65 = vld [vmem:[#allocation2 + $0x3c] sm:$0xf]
    %s66 = scalar_lea.vmem [#allocation2], 64
    %v67 = vld [vmem:[%s66] sm:$0xf]
    %v68 = vld [vmem:[%s66 + $0x4] sm:$0xf]
    %v69 = vld [vmem:[%s66 + $0x8] sm:$0xf]
    %v70 = vld [vmem:[%s66 + $0xc] sm:$0xf]
    %v71 = vld [vmem:[%s66 + $0x10] sm:$0xf]
    %v72 = vld [vmem:[%s66 + $0x14] sm:$0xf]
    %v73 = vld [vmem:[%s66 + $0x18] sm:$0xf]
    %v74 = vld [vmem:[%s66 + $0x1c] sm:$0xf]
    %v75 = vld [vmem:[%s66 + $0x20] sm:$0xf]
    %v76 = vld [vmem:[%s66 + $0x24] sm:$0xf]
    %v77 = vld [vmem:[%s66 + $0x28] sm:$0xf]
    %v78 = vld [vmem:[%s66 + $0x2c] sm:$0xf]
    %v79 = vld [vmem:[%s66 + $0x30] sm:$0xf]
    %v80 = vld [vmem:[%s66 + $0x34] sm:$0xf]
    %v81 = vld [vmem:[%s66 + $0x38] sm:$0xf]
    %v82 = vld [vmem:[%s66 + $0x3c] sm:$0xf]
    %s83 = scalar_lea.vmem [#allocation2], 128
    %v84 = vld [vmem:[%s83] sm:$0xf]
    %v85 = vld [vmem:[%s83 + $0x4] sm:$0xf]
    %v86 = vld [vmem:[%s83 + $0x8] sm:$0xf]
    %v87 = vld [vmem:[%s83 + $0xc] sm:$0xf]
    %v88 = vld [vmem:[%s83 + $0x10] sm:$0xf]
    %v89 = vld [vmem:[%s83 + $0x14] sm:$0xf]
    %v90 = vld [vmem:[%s83 + $0x18] sm:$0xf]
    %v91 = vld [vmem:[%s83 + $0x1c] sm:$0xf]
    %v92 = vld [vmem:[%s83 + $0x20] sm:$0xf]
    %v93 = vld [vmem:[%s83 + $0x24] sm:$0xf]
    %v94 = vld [vmem:[%s83 + $0x28] sm:$0xf]
    %v95 = vld [vmem:[%s83 + $0x2c] sm:$0xf]
    %v96 = vld [vmem:[%s83 + $0x30] sm:$0xf]
    %v97 = vld [vmem:[%s83 + $0x34] sm:$0xf]
    %v98 = vld [vmem:[%s83 + $0x38] sm:$0xf]
    %v99 = vld [vmem:[%s83 + $0x3c] sm:$0xf]
    %v100 = vld [vmem:[%s4] sm:$0xf]
    %vm101 = vcmask 64512
    %v103 = vsel %vm101, %v36, 0
    %vm105 = vcmask 1043456
    %v107 = vsel %vm105, %v45, 0
    %109 = vmatprep.subr.bf16.mxu0 0
    %110 = vmatpush1.bf16.msra.mxu0 %v107
    %111 = vmatprep.subr.bf16.mxu0 0
    %112 = vmatpush1.bf16.msra.mxu0 0
    %113 = vmatprep.subr.bf16.mxu0 0
    %114 = vmatpush1.bf16.msra.mxu0 0
    %115 = vmatprep.subr.bf16.mxu0 0
    %116 = vmatpush1.bf16.msra.mxu0 0
    %117 = vmatprep.subr.bf16.mxu0 0
    %118 = vmatpush1.bf16.msra.mxu0 0
    %119 = vmatprep.subr.bf16.mxu0 0
    %120 = vmatpush1.bf16.msra.mxu0 0
    %121 = vmatprep.subr.bf16.mxu0 0
    %122 = vmatpush1.bf16.msra.mxu0 0
    %123 = vmatprep.subr.bf16.mxu0 0
    %124 = vmatpush1.bf16.msra.mxu0 0
    %125 = vmatprep.subr.bf16.mxu0 0
    %126 = vmatpush1.bf16.msra.mxu0 0
    %127 = vmatprep.subr.bf16.mxu0 0
    %128 = vmatpush1.bf16.msra.mxu0 0
    %129 = vmatprep.subr.bf16.mxu0 0
    %130 = vmatpush1.bf16.msra.mxu0 0
    %131 = vmatprep.subr.bf16.mxu0 0
    %132 = vmatpush1.bf16.msra.mxu0 0
    %133 = vmatprep.subr.bf16.mxu0 0
    %134 = vmatpush1.bf16.msra.mxu0 0
    %135 = vmatprep.subr.bf16.mxu0 0
    %136 = vmatpush1.bf16.msra.mxu0 0
    %137 = vmatprep.subr.bf16.mxu0 0
    %138 = vmatpush1.bf16.msra.mxu0 0
    %139 = vmatprep.subr.bf16.mxu0 0
    %140 = vmatpush1.bf16.msra.mxu0 0
    %141 = vmatprep.mubr.bf16.mxu0 0
    %142 = vmatmul.mubr.bf16.gmra.mrb[0].mxu0 %v103
    %v143 = vpop.f32.mrb[0].mxu0
    %v144 = vadd.f32 0.0, %v143
    %v145 = vpop.f32.mrb[0].mxu0
    %v146 = vpop.f32.mrb[0].mxu0
    %v147 = vpop.f32.mrb[0].mxu0
    %148 = vdwg.mxu0
    %v157 = vunpack.c.l.b16 %v37
    %v158 = vunpack.c.l.b16 %v38
    %v159 = vunpack.c.l.b16 %v39
    %v160 = vunpack.c.l.b16 %v40
    %v161 = vunpack.c.l.b16 %v41
    %v162 = vunpack.c.l.b16 %v42
    %v163 = vunpack.c.l.b16 %v43
    %v164 = vunpack.c.l.b16 %v44
    %v165 = vpack.c.b16 %v158, %v157
    %v166 = vpack.c.b16 %v160, %v159
    %v167 = vpack.c.b16 %v162, %v161
    %v168 = vpack.c.b16 %v164, %v163
    %v170 = vsel %vm101, %v165, 0
    %v173 = vsel %vm101, %v166, 0
    %v176 = vsel %vm101, %v167, 0
    %v179 = vsel %vm101, %v168, 0
    %v182 = vsel %vm105, %v47, 0
    %184 = vmatprep.subr.bf16.mxu0 0
    %185 = vmatpush1.bf16.msra.mxu0 %v182
    %186 = vmatprep.subr.bf16.mxu0 0
    %187 = vmatpush1.bf16.msra.mxu0 0
    %188 = vmatprep.subr.bf16.mxu0 0
    %189 = vmatpush1.bf16.msra.mxu0 0
    %190 = vmatprep.subr.bf16.mxu0 0
    %191 = vmatpush1.bf16.msra.mxu0 0
    %192 = vmatprep.subr.bf16.mxu0 0
    %193 = vmatpush1.bf16.msra.mxu0 0
    %194 = vmatprep.subr.bf16.mxu0 0
    %195 = vmatpush1.bf16.msra.mxu0 0
    %196 = vmatprep.subr.bf16.mxu0 0
    %197 = vmatpush1.bf16.msra.mxu0 0
    %198 = vmatprep.subr.bf16.mxu0 0
    %199 = vmatpush1.bf16.msra.mxu0 0
    %200 = vmatprep.subr.bf16.mxu0 0
    %201 = vmatpush1.bf16.msra.mxu0 0
    %202 = vmatprep.subr.bf16.mxu0 0
    %203 = vmatpush1.bf16.msra.mxu0 0
    %204 = vmatprep.subr.bf16.mxu0 0
    %205 = vmatpush1.bf16.msra.mxu0 0
    %206 = vmatprep.subr.bf16.mxu0 0
    %207 = vmatpush1.bf16.msra.mxu0 0
    %208 = vmatprep.subr.bf16.mxu0 0
    %209 = vmatpush1.bf16.msra.mxu0 0
    %210 = vmatprep.subr.bf16.mxu0 0
    %211 = vmatpush1.bf16.msra.mxu0 0
    %212 = vmatprep.subr.bf16.mxu0 0
    %213 = vmatpush1.bf16.msra.mxu0 0
    %214 = vmatprep.subr.bf16.mxu0 0
    %215 = vmatpush1.bf16.msra.mxu0 0
    %216 = vmatprep.mubr.bf16.mxu0 0
    %217 = vmatmul.mubr.bf16.gmra.mrb[0].mxu0 %v170
    %v218 = vpop.f32.mrb[0].mxu0
    %v219 = vadd.f32 0.0, %v218
    %v220 = vpop.f32.mrb[0].mxu0
    %v221 = vpop.f32.mrb[0].mxu0
    %v222 = vadd.f32 0.0, %v221
    %v223 = vpop.f32.mrb[0].mxu0
    %224 = vmatprep.mubr.bf16.mxu0 0
    %225 = vmatmul.mubr.bf16.gmra.mrb[0].mxu0 %v173
    %v226 = vpop.f32.mrb[0].mxu0
    %v227 = vadd.f32 0.0, %v226
    %v228 = vpop.f32.mrb[0].mxu0
    %v229 = vpop.f32.mrb[0].mxu0
    %v230 = vadd.f32 0.0, %v229
    %v231 = vpop.f32.mrb[0].mxu0
    %232 = vmatprep.mubr.bf16.mxu0 0
    %233 = vmatmul.mubr.bf16.gmra.mrb[0].mxu0 %v176
    %v234 = vpop.f32.mrb[0].mxu0
    %v235 = vadd.f32 0.0, %v234
    %v236 = vpop.f32.mrb[0].mxu0
    %v237 = vpop.f32.mrb[0].mxu0
    %v238 = vadd.f32 0.0, %v237
    %v239 = vpop.f32.mrb[0].mxu0
    %240 = vmatprep.mubr.bf16.mxu0 0
    %241 = vmatmul.mubr.bf16.gmra.mrb[0].mxu0 %v179
    %v242 = vpop.f32.mrb[0].mxu0
    %v243 = vadd.f32 0.0, %v242
    %v244 = vpop.f32.mrb[0].mxu0
    %v245 = vpop.f32.mrb[0].mxu0
    %v246 = vadd.f32 0.0, %v245
    %v247 = vpop.f32.mrb[0].mxu0
    %248 = vdwg.mxu0
    %v250 = vcombine.high %v144, %v144
    %v252 = vunpack.c.l.s4 1966171168
    %v253 = vunpack.c.0.s8 %v252
    %v254 = vlaneseq
    %v255 = vshrl.u32 %v254, 7
    %v256 = vsub.s32 %v253, %v255
    %v257 = vrot.slane %v144, %v256
    %v259 = vunpack.c.l.s4 1966171168
    %v260 = vunpack.c.0.s8 %v259
    %v261 = vlaneseq
    %v262 = vshrl.u32 %v261, 7
    %v263 = vsub.s32 %v260, %v262
    %v264 = vrot.slane %v250, %v263
    %v265 = vcombine.high %v257, %v257
    %v266 = vcombine.high %v264, %v264
    %v268 = vunpack.c.l.s4 1966171168
    %v269 = vunpack.c.0.s8 %v268
    %v270 = vlaneseq
    %v271 = vshrl.u32 %v270, 7
    %v272 = vsub.s32 %v269, %v271
    %v273 = vrot.slane %v257, %v272
    %v275 = vunpack.c.l.s4 1966171168
    %v276 = vunpack.c.0.s8 %v275
    %v277 = vlaneseq
    %v278 = vshrl.u32 %v277, 7
    %v279 = vsub.s32 %v276, %v278
    %v280 = vrot.slane %v264, %v279
    %v282 = vunpack.c.l.s4 1966171168
    %v283 = vunpack.c.0.s8 %v282
    %v284 = vlaneseq
    %v285 = vshrl.u32 %v284, 7
    %v286 = vsub.s32 %v283, %v285
    %v287 = vrot.slane %v265, %v286
    %v289 = vunpack.c.l.s4 1966171168
    %v290 = vunpack.c.0.s8 %v289
    %v291 = vlaneseq
    %v292 = vshrl.u32 %v291, 7
    %v293 = vsub.s32 %v290, %v292
    %v294 = vrot.slane %v266, %v293
    %v295 = vcombine.high %v273, %v273
    %v296 = vcombine.high %v280, %v280
    %v297 = vcombine.high %v287, %v287
    %v298 = vcombine.high %v294, %v294
    %v299 = vlaneseq
    %v300 = vshrl.u32 %v299, 7
    %v301 = vsub.s32 0, %v300
    %v302 = vrot.slane %v273, %v301
    %v303 = vlaneseq
    %v304 = vshrl.u32 %v303, 7
    %v305 = vsub.s32 0, %v304
    %v306 = vrot.slane %v287, %v305
    %v307 = vlaneseq
    %v308 = vshrl.u32 %v307, 7
    %v309 = vsub.s32 0, %v308
    %v310 = vrot.slane %v295, %v309
    %v311 = vlaneseq
    %v312 = vshrl.u32 %v311, 7
    %v313 = vsub.s32 0, %v312
    %v314 = vrot.slane %v297, %v313
    %v315 = vlaneseq
    %v316 = vshrl.u32 %v315, 7
    %v317 = vsub.s32 0, %v316
    %v318 = vrot.slane %v280, %v317
    %v319 = vlaneseq
    %v320 = vshrl.u32 %v319, 7
    %v321 = vsub.s32 0, %v320
    %v322 = vrot.slane %v294, %v321
    %v323 = vlaneseq
    %v324 = vshrl.u32 %v323, 7
    %v325 = vsub.s32 0, %v324
    %v326 = vrot.slane %v296, %v325
    %v327 = vlaneseq
    %v328 = vshrl.u32 %v327, 7
    %v329 = vsub.s32 0, %v328
    %v330 = vrot.slane %v298, %v329
    %v339 = vadd.f32 %v219, %v302
    %v340 = vadd.f32 %v222, %v306
    %v341 = vadd.f32 %v227, %v310
    %v342 = vadd.f32 %v230, %v314
    %v343 = vadd.f32 %v235, %v318
    %v344 = vadd.f32 %v238, %v322
    %v345 = vadd.f32 %v243, %v326
    %v346 = vadd.f32 %v246, %v330
    %v347 = vlaneseq
    %v348 = vshrl.u32 %v347, 7
    %v349 = vsub.s32 0, %v348
    %v350 = vrot.slane %v100, %v349
    %v351 = vadd.f32 %v339, %v350
    %v352 = vadd.f32 %v340, %v350
    %v353 = vadd.f32 %v341, %v350
    %v354 = vadd.f32 %v342, %v350
    %v355 = vadd.f32 %v343, %v350
    %v356 = vadd.f32 %v344, %v350
    %v357 = vadd.f32 %v345, %v350
    %v358 = vadd.f32 %v346, %v350
    %v359 = vmax.f32 %v351, 0.0
    %v360 = vmax.f32 %v352, 0.0
    %v361 = vmax.f32 %v353, 0.0
    %v362 = vmax.f32 %v354, 0.0
    %v363 = vmax.f32 %v355, 0.0
    %v364 = vmax.f32 %v356, 0.0
    %v365 = vmax.f32 %v357, 0.0
    %v366 = vmax.f32 %v358, 0.0
    %v367 = vpack.c.bf16 %v360, %v359
    %v368 = vpack.c.bf16 %v362, %v361
    %v369 = vpack.c.bf16 %v364, %v363
    %v370 = vpack.c.bf16 %v366, %v365
    %v371 = vlaneseq
    %v372 = vshrl.u32 %v371, 7
    %v373 = vsub.s32 1, %v372
    %v374 = vrot.slane %v100, %v373
    %v391 = vunpack.c.l.b16 %v50
    %v392 = vunpack.c.l.b16 %v51
    %v393 = vunpack.c.l.b16 %v52
    %v394 = vunpack.c.l.b16 %v53
    %v395 = vunpack.c.l.b16 %v54
    %v396 = vunpack.c.l.b16 %v55
    %v397 = vunpack.c.l.b16 %v56
    %v398 = vunpack.c.l.b16 %v57
    %v399 = vunpack.c.l.b16 %v58
    %v400 = vunpack.c.l.b16 %v59
    %v401 = vunpack.c.l.b16 %v60
    %v402 = vunpack.c.l.b16 %v61
    %v403 = vunpack.c.l.b16 %v62
    %v404 = vunpack.c.l.b16 %v63
    %v405 = vunpack.c.l.b16 %v64
    %v406 = vunpack.c.l.b16 %v65
    %v407 = vpack.c.b16 %v392, %v391
    %v408 = vpack.c.b16 %v394, %v393
    %v409 = vpack.c.b16 %v396, %v395
    %v410 = vpack.c.b16 %v398, %v397
    %v411 = vpack.c.b16 %v400, %v399
    %v412 = vpack.c.b16 %v402, %v401
    %v413 = vpack.c.b16 %v404, %v403
    %v414 = vpack.c.b16 %v406, %v405
    %423 = vmatprep.subr.bf16.mxu0 0
    %424 = vmatpush1.bf16.msra.mxu0 %v407
    %425 = vmatprep.subr.bf16.mxu0 0
    %426 = vmatpush1.bf16.msra.mxu0 %v408
    %427 = vmatprep.subr.bf16.mxu0 0
    %428 = vmatpush1.bf16.msra.mxu0 %v409
    %429 = vmatprep.subr.bf16.mxu0 0
    %430 = vmatpush1.bf16.msra.mxu0 %v410
    %431 = vmatprep.subr.bf16.mxu0 0
    %432 = vmatpush1.bf16.msra.mxu0 %v411
    %433 = vmatprep.subr.bf16.mxu0 0
    %434 = vmatpush1.bf16.msra.mxu0 %v412
    %435 = vmatprep.subr.bf16.mxu0 0
    %436 = vmatpush1.bf16.msra.mxu0 %v413
    %437 = vmatprep.subr.bf16.mxu0 0
    %438 = vmatpush1.bf16.msra.mxu0 %v414
    %439 = vmatprep.subr.bf16.mxu0 0
    %440 = vmatpush1.bf16.msra.mxu0 0
    %441 = vmatprep.subr.bf16.mxu0 0
    %442 = vmatpush1.bf16.msra.mxu0 0
    %443 = vmatprep.subr.bf16.mxu0 0
    %444 = vmatpush1.bf16.msra.mxu0 0
    %445 = vmatprep.subr.bf16.mxu0 0
    %446 = vmatpush1.bf16.msra.mxu0 0
    %447 = vmatprep.subr.bf16.mxu0 0
    %448 = vmatpush1.bf16.msra.mxu0 0
    %449 = vmatprep.subr.bf16.mxu0 0
    %450 = vmatpush1.bf16.msra.mxu0 0
    %451 = vmatprep.subr.bf16.mxu0 0
    %452 = vmatpush1.bf16.msra.mxu0 0
    %453 = vmatprep.subr.bf16.mxu0 0
    %454 = vmatpush1.bf16.msra.mxu0 0
    %455 = vmatprep.mubr.bf16.mxu0 0
    %456 = vmatmul.mubr.bf16.gmra.mrb[0].mxu0 %v367
    %v457 = vpop.f32.mrb[0].mxu0
    %v458 = vadd.f32 %v374, %v457
    %v459 = vpop.f32.mrb[0].mxu0
    %v460 = vpop.f32.mrb[0].mxu0
    %v461 = vadd.f32 %v374, %v460
    %v462 = vpop.f32.mrb[0].mxu0
    %463 = vmatprep.mubr.bf16.mxu0 0
    %464 = vmatmul.mubr.bf16.gmra.mrb[0].mxu0 %v368
    %v465 = vpop.f32.mrb[0].mxu0
    %v466 = vadd.f32 %v374, %v465
    %v467 = vpop.f32.mrb[0].mxu0
    %v468 = vpop.f32.mrb[0].mxu0
    %v469 = vadd.f32 %v374, %v468
    %v470 = vpop.f32.mrb[0].mxu0
    %471 = vmatprep.mubr.bf16.mxu0 0
    %472 = vmatmul.mubr.bf16.gmra.mrb[0].mxu0 %v369
    %v473 = vpop.f32.mrb[0].mxu0
    %v474 = vadd.f32 %v374, %v473
    %v475 = vpop.f32.mrb[0].mxu0
    %v476 = vpop.f32.mrb[0].mxu0
    %v477 = vadd.f32 %v374, %v476
    %v478 = vpop.f32.mrb[0].mxu0
    %479 = vmatprep.mubr.bf16.mxu0 0
    %480 = vmatmul.mubr.bf16.gmra.mrb[0].mxu0 %v370
    %v481 = vpop.f32.mrb[0].mxu0
    %v482 = vadd.f32 %v374, %v481
    %v483 = vpop.f32.mrb[0].mxu0
    %v484 = vpop.f32.mrb[0].mxu0
    %v485 = vadd.f32 %v374, %v484
    %v486 = vpop.f32.mrb[0].mxu0
    %487 = vdwg.mxu0
    %v488 = vmax.f32 %v458, 0.0
    %v489 = vmax.f32 %v461, 0.0
    %v490 = vmax.f32 %v466, 0.0
    %v491 = vmax.f32 %v469, 0.0
    %v492 = vmax.f32 %v474, 0.0
    %v493 = vmax.f32 %v477, 0.0
    %v494 = vmax.f32 %v482, 0.0
    %v495 = vmax.f32 %v485, 0.0
    %v496 = vrot.slane %v488, 4
    %v497 = vadd.f32 %v488, %v496
    %v498 = vrot.slane %v497, 2
    %v499 = vadd.f32 %v497, %v498
    %v500 = vrot.slane %v499, 1
    %v501 = vadd.f32 %v499, %v500
    %v502 = vrot.slane %v489, 4
    %v503 = vadd.f32 %v489, %v502
    %v504 = vrot.slane %v503, 2
    %v505 = vadd.f32 %v503, %v504
    %v506 = vrot.slane %v505, 1
    %v507 = vadd.f32 %v505, %v506
    %v508 = vrot.slane %v490, 4
    %v509 = vadd.f32 %v490, %v508
    %v510 = vrot.slane %v509, 2
    %v511 = vadd.f32 %v509, %v510
    %v512 = vrot.slane %v511, 1
    %v513 = vadd.f32 %v511, %v512
    %v514 = vrot.slane %v491, 4
    %v515 = vadd.f32 %v491, %v514
    %v516 = vrot.slane %v515, 2
    %v517 = vadd.f32 %v515, %v516
    %v518 = vrot.slane %v517, 1
    %v519 = vadd.f32 %v517, %v518
    %v520 = vrot.slane %v492, 4
    %v521 = vadd.f32 %v492, %v520
    %v522 = vrot.slane %v521, 2
    %v523 = vadd.f32 %v521, %v522
    %v524 = vrot.slane %v523, 1
    %v525 = vadd.f32 %v523, %v524
    %v526 = vrot.slane %v493, 4
    %v527 = vadd.f32 %v493, %v526
    %v528 = vrot.slane %v527, 2
    %v529 = vadd.f32 %v527, %v528
    %v530 = vrot.slane %v529, 1
    %v531 = vadd.f32 %v529, %v530
    %v532 = vrot.slane %v494, 4
    %v533 = vadd.f32 %v494, %v532
    %v534 = vrot.slane %v533, 2
    %v535 = vadd.f32 %v533, %v534
    %v536 = vrot.slane %v535, 1
    %v537 = vadd.f32 %v535, %v536
    %v538 = vrot.slane %v495, 4
    %v539 = vadd.f32 %v495, %v538
    %v540 = vrot.slane %v539, 2
    %v541 = vadd.f32 %v539, %v540
    %v542 = vrot.slane %v541, 1
    %v543 = vadd.f32 %v541, %v542
    %v544 = vmul.f32 %v501, 0.125
    %v545 = vmul.f32 %v507, 0.125
    %v546 = vmul.f32 %v513, 0.125
    %v547 = vmul.f32 %v519, 0.125
    %v548 = vmul.f32 %v525, 0.125
    %v549 = vmul.f32 %v531, 0.125
    %v550 = vmul.f32 %v537, 0.125
    %v551 = vmul.f32 %v543, 0.125
    %v552 = vpack.c.bf16 %v544, %v544
    %v553 = vpack.c.bf16 %v545, %v545
    %v554 = vpack.c.bf16 %v546, %v546
    %v555 = vpack.c.bf16 %v547, %v547
    %v556 = vpack.c.bf16 %v548, %v548
    %v557 = vpack.c.bf16 %v549, %v549
    %v558 = vpack.c.bf16 %v550, %v550
    %v559 = vpack.c.bf16 %v551, %v551
    %v560 = vlaneseq
    %v561 = vshrl.u32 %v560, 7
    %v562 = vsub.s32 2, %v561
    %v563 = vrot.slane %v100, %v562
    %v572 = vunpack.c.l.b16 %v552
    %v573 = vunpack.c.l.b16 %v553
    %v574 = vunpack.c.l.b16 %v554
    %v575 = vunpack.c.l.b16 %v555
    %v576 = vunpack.c.l.b16 %v556
    %v577 = vunpack.c.l.b16 %v557
    %v578 = vunpack.c.l.b16 %v558
    %v579 = vunpack.c.l.b16 %v559
    %vm580 = vcmask 1041409
    %v581 = vsel %vm580, %v573, %v572
    %vm582 = vcmask 1042434
    %v583 = vsel %vm582, %v574, %v581
    %vm584 = vcmask 1043459
    %v585 = vsel %vm584, %v575, %v583
    %vm586 = vcmask 1044484
    %v587 = vsel %vm586, %v576, %v585
    %vm588 = vcmask 1045509
    %v589 = vsel %vm588, %v577, %v587
    %vm590 = vcmask 1046534
    %v591 = vsel %vm590, %v578, %v589
    %vm592 = vcmask 1047559
    %v593 = vsel %vm592, %v579, %v591
    %v594 = vpack.c.b16 %v593, %v593
    %v612 = vunpack.c.l.b16 %v67
    %v613 = vunpack.c.l.b16 %v68
    %v614 = vunpack.c.l.b16 %v69
    %v615 = vunpack.c.l.b16 %v70
    %v616 = vunpack.c.l.b16 %v71
    %v617 = vunpack.c.l.b16 %v72
    %v618 = vunpack.c.l.b16 %v73
    %v619 = vunpack.c.l.b16 %v74
    %v620 = vunpack.c.l.b16 %v75
    %v621 = vunpack.c.l.b16 %v76
    %v622 = vunpack.c.l.b16 %v77
    %v623 = vunpack.c.l.b16 %v78
    %v624 = vunpack.c.l.b16 %v79
    %v625 = vunpack.c.l.b16 %v80
    %v626 = vunpack.c.l.b16 %v81
    %v627 = vunpack.c.l.b16 %v82
    %v628 = vpack.c.b16 %v613, %v612
    %v629 = vpack.c.b16 %v615, %v614
    %v630 = vpack.c.b16 %v617, %v616
    %v631 = vpack.c.b16 %v619, %v618
    %v632 = vpack.c.b16 %v621, %v620
    %v633 = vpack.c.b16 %v623, %v622
    %v634 = vpack.c.b16 %v625, %v624
    %v635 = vpack.c.b16 %v627, %v626
    %644 = vmatprep.subr.bf16.mxu0 0
    %645 = vmatpush1.bf16.msra.mxu0 %v628
    %646 = vmatprep.subr.bf16.mxu0 0
    %647 = vmatpush1.bf16.msra.mxu0 %v629
    %648 = vmatprep.subr.bf16.mxu0 0
    %649 = vmatpush1.bf16.msra.mxu0 %v630
    %650 = vmatprep.subr.bf16.mxu0 0
    %651 = vmatpush1.bf16.msra.mxu0 %v631
    %652 = vmatprep.subr.bf16.mxu0 0
    %653 = vmatpush1.bf16.msra.mxu0 %v632
    %654 = vmatprep.subr.bf16.mxu0 0
    %655 = vmatpush1.bf16.msra.mxu0 %v633
    %656 = vmatprep.subr.bf16.mxu0 0
    %657 = vmatpush1.bf16.msra.mxu0 %v634
    %658 = vmatprep.subr.bf16.mxu0 0
    %659 = vmatpush1.bf16.msra.mxu0 %v635
    %660 = vmatprep.subr.bf16.mxu0 0
    %661 = vmatpush1.bf16.msra.mxu0 0
    %662 = vmatprep.subr.bf16.mxu0 0
    %663 = vmatpush1.bf16.msra.mxu0 0
    %664 = vmatprep.subr.bf16.mxu0 0
    %665 = vmatpush1.bf16.msra.mxu0 0
    %666 = vmatprep.subr.bf16.mxu0 0
    %667 = vmatpush1.bf16.msra.mxu0 0
    %668 = vmatprep.subr.bf16.mxu0 0
    %669 = vmatpush1.bf16.msra.mxu0 0
    %670 = vmatprep.subr.bf16.mxu0 0
    %671 = vmatpush1.bf16.msra.mxu0 0
    %672 = vmatprep.subr.bf16.mxu0 0
    %673 = vmatpush1.bf16.msra.mxu0 0
    %674 = vmatprep.subr.bf16.mxu0 0
    %675 = vmatpush1.bf16.msra.mxu0 0
    %676 = vmatprep.mubr.bf16.mxu0 0
    %677 = vmatmul.mubr.bf16.gmra.mrb[0].mxu0 %v594
    %v678 = vpop.f32.mrb[0].mxu0
    %v679 = vadd.f32 %v563, %v678
    %v680 = vpop.f32.mrb[0].mxu0
    %v681 = vpop.f32.mrb[0].mxu0
    %v682 = vpop.f32.mrb[0].mxu0
    %683 = vdwg.mxu0
    %v684 = vpack.c.bf16 %v679, %v679
    %v701 = vunpack.c.l.b16 %v84
    %v702 = vunpack.c.l.b16 %v85
    %v703 = vunpack.c.l.b16 %v86
    %v704 = vunpack.c.l.b16 %v87
    %v705 = vunpack.c.l.b16 %v88
    %v706 = vunpack.c.l.b16 %v89
    %v707 = vunpack.c.l.b16 %v90
    %v708 = vunpack.c.l.b16 %v91
    %v709 = vunpack.c.l.b16 %v92
    %v710 = vunpack.c.l.b16 %v93
    %v711 = vunpack.c.l.b16 %v94
    %v712 = vunpack.c.l.b16 %v95
    %v713 = vunpack.c.l.b16 %v96
    %v714 = vunpack.c.l.b16 %v97
    %v715 = vunpack.c.l.b16 %v98
    %v716 = vunpack.c.l.b16 %v99
    %v717 = vpack.c.b16 %v702, %v701
    %v718 = vpack.c.b16 %v704, %v703
    %v719 = vpack.c.b16 %v706, %v705
    %v720 = vpack.c.b16 %v708, %v707
    %v721 = vpack.c.b16 %v710, %v709
    %v722 = vpack.c.b16 %v712, %v711
    %v723 = vpack.c.b16 %v714, %v713
    %v724 = vpack.c.b16 %v716, %v715
    %733 = vmatprep.subr.bf16.mxu0 0
    %734 = vmatpush1.bf16.msra.mxu0 %v717
    %735 = vmatprep.subr.bf16.mxu0 0
    %736 = vmatpush1.bf16.msra.mxu0 %v718
    %737 = vmatprep.subr.bf16.mxu0 0
    %738 = vmatpush1.bf16.msra.mxu0 %v719
    %739 = vmatprep.subr.bf16.mxu0 0
    %740 = vmatpush1.bf16.msra.mxu0 %v720
    %741 = vmatprep.subr.bf16.mxu0 0
    %742 = vmatpush1.bf16.msra.mxu0 %v721
    %743 = vmatprep.subr.bf16.mxu0 0
    %744 = vmatpush1.bf16.msra.mxu0 %v722
    %745 = vmatprep.subr.bf16.mxu0 0
    %746 = vmatpush1.bf16.msra.mxu0 %v723
    %747 = vmatprep.subr.bf16.mxu0 0
    %748 = vmatpush1.bf16.msra.mxu0 %v724
    %749 = vmatprep.subr.bf16.mxu0 0
    %750 = vmatpush1.bf16.msra.mxu0 0
    %751 = vmatprep.subr.bf16.mxu0 0
    %752 = vmatpush1.bf16.msra.mxu0 0
    %753 = vmatprep.subr.bf16.mxu0 0
    %754 = vmatpush1.bf16.msra.mxu0 0
    %755 = vmatprep.subr.bf16.mxu0 0
    %756 = vmatpush1.bf16.msra.mxu0 0
    %757 = vmatprep.subr.bf16.mxu0 0
    %758 = vmatpush1.bf16.msra.mxu0 0
    %759 = vmatprep.subr.bf16.mxu0 0
    %760 = vmatpush1.bf16.msra.mxu0 0
    %761 = vmatprep.subr.bf16.mxu0 0
    %762 = vmatpush1.bf16.msra.mxu0 0
    %763 = vmatprep.subr.bf16.mxu0 0
    %764 = vmatpush1.bf16.msra.mxu0 0
    %765 = vmatprep.mubr.bf16.mxu0 0
    %766 = vmatmul.mubr.bf16.gmra.mrb[0].mxu0 %v684
    %v767 = vpop.f32.mrb[0].mxu0
    %v768 = vadd.f32 0.0, %v767
    %v769 = vpop.f32.mrb[0].mxu0
    %v770 = vpop.f32.mrb[0].mxu0
    %v771 = vpop.f32.mrb[0].mxu0
    %772 = vdwg.mxu0
    %v774 = vsel %vm105, %v49, 0
    %776 = vmatprep.subr.bf16.mxu0 0
    %777 = vmatpush1.bf16.msra.mxu0 %v774
    %778 = vmatprep.subr.bf16.mxu0 0
    %779 = vmatpush1.bf16.msra.mxu0 0
    %780 = vmatprep.subr.bf16.mxu0 0
    %781 = vmatpush1.bf16.msra.mxu0 0
    %782 = vmatprep.subr.bf16.mxu0 0
    %783 = vmatpush1.bf16.msra.mxu0 0
    %784 = vmatprep.subr.bf16.mxu0 0
    %785 = vmatpush1.bf16.msra.mxu0 0
    %786 = vmatprep.subr.bf16.mxu0 0
    %787 = vmatpush1.bf16.msra.mxu0 0
    %788 = vmatprep.subr.bf16.mxu0 0
    %789 = vmatpush1.bf16.msra.mxu0 0
    %790 = vmatprep.subr.bf16.mxu0 0
    %791 = vmatpush1.bf16.msra.mxu0 0
    %792 = vmatprep.subr.bf16.mxu0 0
    %793 = vmatpush1.bf16.msra.mxu0 0
    %794 = vmatprep.subr.bf16.mxu0 0
    %795 = vmatpush1.bf16.msra.mxu0 0
    %796 = vmatprep.subr.bf16.mxu0 0
    %797 = vmatpush1.bf16.msra.mxu0 0
    %798 = vmatprep.subr.bf16.mxu0 0
    %799 = vmatpush1.bf16.msra.mxu0 0
    %800 = vmatprep.subr.bf16.mxu0 0
    %801 = vmatpush1.bf16.msra.mxu0 0
    %802 = vmatprep.subr.bf16.mxu0 0
    %803 = vmatpush1.bf16.msra.mxu0 0
    %804 = vmatprep.subr.bf16.mxu0 0
    %805 = vmatpush1.bf16.msra.mxu0 0
    %806 = vmatprep.subr.bf16.mxu0 0
    %807 = vmatpush1.bf16.msra.mxu0 0
    %808 = vmatprep.mubr.bf16.mxu0 0
    %809 = vmatmul.mubr.bf16.gmra.mrb[0].mxu0 %v103
    %v810 = vpop.f32.mrb[0].mxu0
    %v811 = vadd.f32 %v768, %v810
    %v812 = vpop.f32.mrb[0].mxu0
    %v813 = vpop.f32.mrb[0].mxu0
    %v814 = vpop.f32.mrb[0].mxu0
    %815 = vdwg.mxu0
    %v816 = vlaneseq
    %v817 = vshrl.u32 %v816, 7
    %v818 = vsub.s32 3, %v817
    %v819 = vrot.slane %v100, %v818
    %v820 = vadd.f32 %v811, %v819
    %821 = vst [vmem:[#allocation5] sm:$0xff] %v820
    // Predicated region
    $region26: #{tpu_custom_call.1} parent=1 // pred_check
      _
    $region27: #{tpu_custom_call.1} parent=1 // pred_check_branch
      %823 = sbr.rel (0) target = $region29
    $region28: #{tpu_custom_call.1} parent=1 // pred_region
      %s825 = ssub.s32 128, 128
      %826 = vsyncadd [#allocation4], %s825
      %s828 = sshll.u32 [#allocation5], 4
      %s829 = int_to_ptr.vmem [resolvable:$true] %s828
      %831 = dma.vmem_to_hbm [thread:$0]  %s829, 128, %s5, [#allocation4]
    $region29: #{tpu_custom_call.1} parent=1 // pred_fallthru
      _
    // Predicated region
    $region30: #{tpu_custom_call.1} parent=1 // pred_check
      _
    $region31: #{tpu_custom_call.1} parent=1 // pred_check_branch
      %833 = sbr.rel (0) target = $region33
    $region32: #{tpu_custom_call.1} parent=1 // pred_region
      %834 = dma.done [#allocation4], 128
    $region33: #{tpu_custom_call.1} parent=1 // pred_fallthru
      _
    %835 = vsyncpa [#allocation3], 1
    %836 = vsyncpa [#allocation4], 1

</llo_original>
